<compile_context>
chip_gen: v7x
topology: tpu7x:2x2x1
jax: 0.10.0
libtpu: 0.0.40
codegen_flags: <defaults>
</compile_context>

<pallas_src>
import jax
import jax.numpy as jnp
from jax.experimental import pallas as pl
from jax.experimental.pallas import tpu as pltpu


# ---- packed parameter buffer layout (rows x 128 lanes, all offsets % 8 == 0) ----
# Invariant the kernel relies on: the w2/w3/w4 reads span 128 rows each, which
# includes the zero-padded "gap" rows between the real weights; pack_params()
# zero-initializes the whole buffer, and the padded activation lanes 64..127
# stay exactly zero through bias-add + ReLU, so the math matches torch exactly.
_W1_OFF = 0      # (21, 64)  stored at rows [0, 21),    cols [0, 64)
_W2_OFF = 32     # (64, 128) stored at rows [32, 96),   cols [0, 128)
_W3_OFF = 160    # (128, 64) stored at rows [160, 288), cols [0, 64)
_W4_OFF = 288    # (64, 3)   stored at rows [288, 352), cols [0, 3)
_B1_OFF = 416    # (64,)  at row 416, cols [0, 64)
_B2_OFF = 424    # (128,) at row 424
_B3_OFF = 432    # (64,)  at row 432, cols [0, 64)
_B4_OFF = 440    # (3,)   at row 440, cols [0, 3)
_P_ROWS = 448
_P_COLS = 128

_IN_DIM = 21
_OUT_DIM = 3

# Static layout checks: the 128-row weight windows must never overlap the bias
# rows (the reviewer's fragility concern) and must fit in the buffer.
assert _W2_OFF >= _W1_OFF + _IN_DIM
assert _W3_OFF >= _W2_OFF + 128
assert _W4_OFF >= _W3_OFF + 128
assert _B1_OFF >= _W4_OFF + 128          # w4 window [288, 416) ends before biases
assert _P_ROWS >= _B4_OFF + 8
assert all(off % 8 == 0 for off in
           (_W1_OFF, _W2_OFF, _W3_OFF, _W4_OFF, _B1_OFF, _B2_OFF, _B3_OFF, _B4_OFF))


def _round_up(x, m):
    return ((x + m - 1) // m) * m


def _policy_mlp_kernel(x_ref, p_ref, o_ref):
    """4-layer MLP on one batch tile; all parameters live in one VMEM buffer."""
    x = x_ref[...]                                   # (TILE_B, 21) f32

    # Static slices of the packed parameter buffer. The buffer has a constant
    # index_map, so it is copied HBM->VMEM once and reused across grid steps.
    w1 = p_ref[_W1_OFF:_W1_OFF + _IN_DIM, :]         # (21, 128)  cols 64..127 are 0
    w2 = p_ref[_W2_OFF:_W2_OFF + 128, :]             # (128, 128) rows 64..127 are 0
    w3 = p_ref[_W3_OFF:_W3_OFF + 128, :]             # (128, 128) cols 64..127 are 0
    w4 = p_ref[_W4_OFF:_W4_OFF + 128, :]             # (128, 128) only cols 0..2 nonzero
    b1 = p_ref[_B1_OFF:_B1_OFF + 1, :]               # (1, 128)
    b2 = p_ref[_B2_OFF:_B2_OFF + 1, :]
    b3 = p_ref[_B3_OFF:_B3_OFF + 1, :]
    b4 = p_ref[_B4_OFF:_B4_OFF + 1, :]

    h = jnp.maximum(jnp.dot(x, w1, preferred_element_type=jnp.float32) + b1, 0.0)
    h = jnp.maximum(jnp.dot(h, w2, preferred_element_type=jnp.float32) + b2, 0.0)
    h = jnp.maximum(jnp.dot(h, w3, preferred_element_type=jnp.float32) + b3, 0.0)
    out = jnp.dot(h, w4, preferred_element_type=jnp.float32) + b4   # (TILE_B, 128)

    # Lane-dense store of the full 128-wide block (lanes 3..127 are exact
    # zeros + b4-padding zeros); the wrapper slices [:, :3].
    o_ref[...] = out


def _choose_tile_b(batch, max_tile_b):
    """Pick the batch tile: as big as possible, but >=2 grid steps for big B."""
    b8 = _round_up(max(batch, 1), 8)
    max_tb = max(8, _round_up(min(max_tile_b, 8192), 8))
    tb = min(max_tb, b8)
    # v7x megacore: if the whole (large) batch fits in one tile, split it in
    # two so both TensorCores get work. Small batches stay single-step.
    if tb == b8 and b8 >= 2048:
        tb = _round_up((b8 + 1) // 2, 8)
    return tb


def policy_network_forward(state, packed_params, *, tile_b=4096):
    """state: (B, 21) f32, packed_params: (448, 128) f32 -> logits (B, 3) f32."""
    B, F = state.shape
    assert F == _IN_DIM, f"expected {_IN_DIM} input features, got {F}"
    assert packed_params.shape == (_P_ROWS, _P_COLS)
    assert packed_params.dtype == jnp.float32

    tb = _choose_tile_b(B, tile_b)
    grid = (pl.cdiv(B, tb),)

    cost = pl.CostEstimate(
        flops=2 * B * (_IN_DIM * 128 + 3 * 128 * 128),
        transcendentals=0,
        bytes_accessed=B * _IN_DIM * 4 + B * _P_COLS * 4 + _P_ROWS * _P_COLS * 4,
    )

    padded_out = pl.pallas_call(
        _policy_mlp_kernel,
        out_shape=jax.ShapeDtypeStruct((B, _P_COLS), jnp.float32),
        grid=grid,
        in_specs=[
            pl.BlockSpec((tb, _IN_DIM), lambda i: (i, 0)),       # batch tile of state
            pl.BlockSpec((_P_ROWS, _P_COLS), lambda i: (0, 0)),  # params: VMEM-resident
        ],
        out_specs=pl.BlockSpec((tb, _P_COLS), lambda i: (i, 0)),  # lane-dense writeback
        compiler_params=pltpu.CompilerParams(
            dimension_semantics=("parallel",),      # v7x: 2 TCs share the batch axis
            vmem_limit_bytes=48 * 1024 * 1024,      # v5e default 16 MiB is too small
        ),
        cost_estimate=cost,
    )(state, packed_params)

    # Only the first 3 lanes carry real logits; the rest are exact zeros.
    return padded_out[:, :_OUT_DIM]


def init_params(key):
    """Torch-style init; weights stored (in, out) so the kernel does x @ W + b."""
    dims = [(21, 64), (64, 128), (128, 64), (64, 3)]
    params = []
    for (fan_in, fan_out) in dims:
        key, kw, kb = jax.random.split(key, 3)
        bound = 1.0 / jnp.sqrt(fan_in)
        w = jax.random.uniform(kw, (fan_in, fan_out), jnp.float32, -bound, bound)
        b = jax.random.uniform(kb, (fan_out,), jnp.float32, -bound, bound)
        params.append((w, b))
    return params


def pack_params(params):
    """Pack the 4 (W, b) pairs into one zero-padded (448, 128) f32 buffer."""
    (w1, b1), (w2, b2), (w3, b3), (w4, b4) = params
    assert w1.shape == (21, 64) and w2.shape == (64, 128)
    assert w3.shape == (128, 64) and w4.shape == (64, 3)
    p = jnp.zeros((_P_ROWS, _P_COLS), jnp.float32)   # gaps MUST stay zero (see layout)
    p = p.at[_W1_OFF:_W1_OFF + 21, 0:64].set(w1)
    p = p.at[_W2_OFF:_W2_OFF + 64, 0:128].set(w2)
    p = p.at[_W3_OFF:_W3_OFF + 128, 0:64].set(w3)
    p = p.at[_W4_OFF:_W4_OFF + 64, 0:3].set(w4)
    p = p.at[_B1_OFF, 0:64].set(b1.reshape(-1))
    p = p.at[_B2_OFF, 0:128].set(b2.reshape(-1))
    p = p.at[_B3_OFF, 0:64].set(b3.reshape(-1))
    p = p.at[_B4_OFF, 0:3].set(b4.reshape(-1))
    return p


def _reference_forward(state, params):
    h = state
    for i, (w, b) in enumerate(params):
        h = h @ w + b
        if i < len(params) - 1:
            h = jnp.maximum(h, 0.0)
    return h


if __name__ == "__main__":
    key = jax.random.PRNGKey(0)
    key, kx1, kx2, kx3 = jax.random.split(key, 4)

    params = init_params(key)
    packed = pack_params(params)

    # Small deterministic checks: single tile, multi-step grid, ragged batch.
    cases = [
        (jax.random.normal(kx1, (8, _IN_DIM), dtype=jnp.float32), {}),
        (jax.random.normal(kx2, (24, _IN_DIM), dtype=jnp.float32), {"tile_b": 8}),
        (jax.random.normal(kx3, (13, _IN_DIM), dtype=jnp.float32), {"tile_b": 8}),
    ]
    for state, kwargs in cases:
        out = policy_network_forward(state, packed, **kwargs)
        out = jax.block_until_ready(out)
        ref = _reference_forward(state, params)
        assert out.shape == (state.shape[0], _OUT_DIM), out.shape
        assert jnp.allclose(out, ref, atol=1e-5, rtol=1e-5), "mismatch vs reference"

    # TODO(synk): optimizer / loss construction from the torch module are
    # training-time concerns and are intentionally not part of this forward kernel.
    print("KERNEL_OK")
</pallas_src>

<mosaic_0001>
module attributes {stable_mosaic.version = 11 : i64} {
  func.func @_policy_mlp_kernel(%arg0: i32, %arg1: memref<8x21xf32, #tpu.memory_space<vmem>>, %arg2: memref<448x128xf32, #tpu.memory_space<vmem>>, %arg3: memref<8x128xf32, #tpu.memory_space<vmem>>) attributes {dimension_semantics = [#tpu.dimension_semantics<parallel>], iteration_bounds = array<i64: 1>, scalar_prefetch = 0 : i64, scratch_operands = 0 : i64, tpu.core_type = #tpu.core_type<tc>, window_params = [{transform_indices = @transform_0, window_bounds = array<i64: 8, 21>}, {pipeline_mode = #tpu.pipeline_mode<synchronous>, transform_indices = @transform_1, window_bounds = array<i64: 448, 128>}, {transform_indices = @transform_2, window_bounds = array<i64: 8, 128>}]} {
    %c0 = arith.constant 0 : index
    %c0_0 = arith.constant 0 : index
    %0 = vector.load %arg1[%c0, %c0_0] : memref<8x21xf32, #tpu.memory_space<vmem>>, vector<8x21xf32>
    %c0_1 = arith.constant 0 : index
    %c0_2 = arith.constant 0 : index
    %1 = vector.load %arg2[%c0_1, %c0_2] : memref<448x128xf32, #tpu.memory_space<vmem>>, vector<21x128xf32>
    %c32 = arith.constant 32 : index
    %c0_3 = arith.constant 0 : index
    %2 = vector.load %arg2[%c32, %c0_3] : memref<448x128xf32, #tpu.memory_space<vmem>>, vector<128x128xf32>
    %c160 = arith.constant 160 : index
    %c0_4 = arith.constant 0 : index
    %3 = vector.load %arg2[%c160, %c0_4] : memref<448x128xf32, #tpu.memory_space<vmem>>, vector<128x128xf32>
    %c288 = arith.constant 288 : index
    %c0_5 = arith.constant 0 : index
    %4 = vector.load %arg2[%c288, %c0_5] : memref<448x128xf32, #tpu.memory_space<vmem>>, vector<128x128xf32>
    %c416 = arith.constant 416 : index
    %c0_6 = arith.constant 0 : index
    %5 = vector.load %arg2[%c416, %c0_6] : memref<448x128xf32, #tpu.memory_space<vmem>>, vector<1x128xf32>
    %c424 = arith.constant 424 : index
    %c0_7 = arith.constant 0 : index
    %6 = vector.load %arg2[%c424, %c0_7] : memref<448x128xf32, #tpu.memory_space<vmem>>, vector<1x128xf32>
    %c432 = arith.constant 432 : index
    %c0_8 = arith.constant 0 : index
    %7 = vector.load %arg2[%c432, %c0_8] : memref<448x128xf32, #tpu.memory_space<vmem>>, vector<1x128xf32>
    %c440 = arith.constant 440 : index
    %c0_9 = arith.constant 0 : index
    %8 = vector.load %arg2[%c440, %c0_9] : memref<448x128xf32, #tpu.memory_space<vmem>>, vector<1x128xf32>
    %cst = arith.constant dense<0.000000e+00> : vector<8x128xf32>
    %9 = tpu.matmul %0, %1, %cst {dimension_numbers = #tpu.dot_dimension_numbers<[1], [0], [0], [1], [0, 0, 1, 1], [], []>} : vector<8x21xf32>, vector<21x128xf32>, vector<8x128xf32> -> vector<8x128xf32>
    %10 = vector.broadcast %5 : vector<1x128xf32> to vector<8x128xf32>
    %11 = arith.addf %9, %10 : vector<8x128xf32>
    %cst_10 = arith.constant 0.000000e+00 : f32
    %12 = vector.broadcast %cst_10 : f32 to vector<8x128xf32>
    %13 = arith.maximumf %11, %12 : vector<8x128xf32>
    %cst_11 = arith.constant dense<0.000000e+00> : vector<8x128xf32>
    %14 = tpu.matmul %13, %2, %cst_11 {dimension_numbers = #tpu.dot_dimension_numbers<[1], [0], [0], [1], [0, 0, 1, 1], [], []>} : vector<8x128xf32>, vector<128x128xf32>, vector<8x128xf32> -> vector<8x128xf32>
    %15 = vector.broadcast %6 : vector<1x128xf32> to vector<8x128xf32>
    %16 = arith.addf %14, %15 : vector<8x128xf32>
    %cst_12 = arith.constant 0.000000e+00 : f32
    %17 = vector.broadcast %cst_12 : f32 to vector<8x128xf32>
    %18 = arith.maximumf %16, %17 : vector<8x128xf32>
    %cst_13 = arith.constant dense<0.000000e+00> : vector<8x128xf32>
    %19 = tpu.matmul %18, %3, %cst_13 {dimension_numbers = #tpu.dot_dimension_numbers<[1], [0], [0], [1], [0, 0, 1, 1], [], []>} : vector<8x128xf32>, vector<128x128xf32>, vector<8x128xf32> -> vector<8x128xf32>
    %20 = vector.broadcast %7 : vector<1x128xf32> to vector<8x128xf32>
    %21 = arith.addf %19, %20 : vector<8x128xf32>
    %cst_14 = arith.constant 0.000000e+00 : f32
    %22 = vector.broadcast %cst_14 : f32 to vector<8x128xf32>
    %23 = arith.maximumf %21, %22 : vector<8x128xf32>
    %cst_15 = arith.constant dense<0.000000e+00> : vector<8x128xf32>
    %24 = tpu.matmul %23, %4, %cst_15 {dimension_numbers = #tpu.dot_dimension_numbers<[1], [0], [0], [1], [0, 0, 1, 1], [], []>} : vector<8x128xf32>, vector<128x128xf32>, vector<8x128xf32> -> vector<8x128xf32>
    %25 = vector.broadcast %8 : vector<1x128xf32> to vector<8x128xf32>
    %26 = arith.addf %24, %25 : vector<8x128xf32>
    %c0_16 = arith.constant 0 : index
    %c0_17 = arith.constant 0 : index
    %27 = vector.load %arg3[%c0_16, %c0_17] : memref<8x128xf32, #tpu.memory_space<vmem>>, vector<8x128xf32>
    tpu.vector_store %arg3[%c0_16, %c0_17], %26 {strides = array<i32>} : memref<8x128xf32, #tpu.memory_space<vmem>>, vector<8x128xf32>,
    return
  }
  func.func @transform_0(%arg0: i32) -> (i32, i32) {
    %c0_i32 = arith.constant 0 : i32
    %c0_i32_0 = arith.constant 0 : i32
    return %arg0, %c0_i32 : i32, i32
  }
  func.func @transform_1(%arg0: i32) -> (i32, i32) {
    %c0_i32 = arith.constant 0 : i32
    %c0_i32_0 = arith.constant 0 : i32
    %c0_i32_1 = arith.constant 0 : i32
    return %c0_i32, %c0_i32_0 : i32, i32
  }
  func.func @transform_2(%arg0: i32) -> (i32, i32) {
    %c0_i32 = arith.constant 0 : i32
    %c0_i32_0 = arith.constant 0 : i32
    return %arg0, %c0_i32 : i32, i32
  }
}

</mosaic_0001>

<llo_original>
// kernel: tpu_custom_call.1
$region0: #{tpu_custom_call.1}
  #allocation0 [shape = 'u32[]', space=smem, size = 0x4, offset = 0x4, fixed_abs, tag = 'smem constant byte address 0x4 - core index']
  #allocation1 [shape = 'u32[144,128]{1,0:T(1,128)}', space=vmem, size = 0x12000, scoped, tag = 'internal scratch']
  %s0 = inlined_call_operand.hbm [shape: f32[8,21], index: 0, kind: input, shape index: {}]
  %s1 = inlined_call_operand.hbm [shape: f32[448,128], index: 1, kind: input, shape index: {}]
  %s2 = inlined_call_operand.hbm [shape: f32[8,128], index: 2, kind: output, shape index: {}]
  %s3 = sld [smem:[#allocation0]]
  $region26: #{tpu_custom_call.1} parent=0
    _
  %s5 = ssub.s32 1, %s3
  %s6 = scalar_select 0, %s5, %s3
  $region1: #{tpu_custom_call.1} parent=0
    #allocation2 [shape = 'u8[4096]{0}', space=vmem, size = 0x1000, scoped, tag = 'input window, operand 0, single buffered']
    #allocation3 [shape = 's32[1]{0}', space=sflag, size = 0x4, scoped, tag = 'scoped memory for tpu_custom_call.1']
    #allocation4 [shape = 's32[1]{0}', space=sflag, size = 0x4, scoped, tag = 'scoped memory for tpu_custom_call.1']
    #allocation5 [shape = 'u8[229376]{0}', space=vmem, size = 0x38000, scoped, tag = 'input window, operand 1, single buffered']
    #allocation6 [shape = 's32[1]{0}', space=sflag, size = 0x4, scoped, tag = 'scoped memory for tpu_custom_call.1']
    #allocation7 [shape = 'u8[4096]{0}', space=vmem, size = 0x1000, scoped, tag = 'output window, operand 0, single buffered']
    %7 = vsyncpa [#allocation3], 0
    %8 = vsyncpa [#allocation6], 0
    %9 = vsyncpa [#allocation4], 0
    // Predicated region
    $region2: #{tpu_custom_call.1} parent=1 // pred_check
      _
    $region3: #{tpu_custom_call.1} parent=1 // pred_check_branch
      %11 = sbr.rel (0) target = $region5
    $region4: #{tpu_custom_call.1} parent=1 // pred_region
      %s13 = ssub.s32 128, 128
      %14 = vsyncadd [#allocation3], %s13
      %s16 = sshll.u32 [#allocation2], 4
      %s17 = int_to_ptr.vmem [resolvable:$true] %s16
      %19 = dma.hbm_to_vmem [thread:$0]  %s0, 128, %s17, [#allocation3]
    $region5: #{tpu_custom_call.1} parent=1 // pred_fallthru
      _
    // Predicated region
    $region6: #{tpu_custom_call.1} parent=1 // pred_check
      _
    $region7: #{tpu_custom_call.1} parent=1 // pred_check_branch
      %21 = sbr.rel (0) target = $region9
    $region8: #{tpu_custom_call.1} parent=1 // pred_region
      %s23 = ssub.s32 7168, 7168
      %24 = vsyncadd [#allocation6], %s23
      %s25 = sshll.u32 [#allocation5], 4
      %s26 = int_to_ptr.vmem [resolvable:$true] %s25
      %31 = dma.hbm_to_vmem [thread:$0]  %s1, 7168, %s26, [#allocation6], 128, 128, 8
    $region9: #{tpu_custom_call.1} parent=1 // pred_fallthru
      _
    // Predicated region
    $region10: #{tpu_custom_call.1} parent=1 // pred_check
      _
    $region11: #{tpu_custom_call.1} parent=1 // pred_check_branch
      %33 = sbr.rel (0) target = $region13
    $region12: #{tpu_custom_call.1} parent=1 // pred_region
      %34 = dma.done [#allocation3], 128
    $region13: #{tpu_custom_call.1} parent=1 // pred_fallthru
      _
    // Predicated region
    $region14: #{tpu_custom_call.1} parent=1 // pred_check
      _
    $region15: #{tpu_custom_call.1} parent=1 // pred_check_branch
      %36 = sbr.rel (0) target = $region17
    $region16: #{tpu_custom_call.1} parent=1 // pred_region
      %37 = dma.done [#allocation6], 7168
    $region17: #{tpu_custom_call.1} parent=1 // pred_fallthru
      _
    %v38 = vld [vmem:[#allocation2] sm:$0xff]
    %v39 = vld [vmem:[#allocation5] sm:$0xff]
    %v40 = vld [vmem:[#allocation5 + $0x8] sm:$0xff]
    %v41 = vld [vmem:[#allocation5 + $0x10] sm:$0x1f]
    %v42 = vld [vmem:[#allocation5 + $0x20] sm:$0xff]
    %v43 = vld [vmem:[#allocation5 + $0x28] sm:$0xff]
    %v44 = vld [vmem:[#allocation5 + $0x30] sm:$0xff]
    %v45 = vld [vmem:[#allocation5 + $0x38] sm:$0xff]
    %v46 = vld [vmem:[#allocation5 + $0x40] sm:$0xff]
    %v47 = vld [vmem:[#allocation5 + $0x48] sm:$0xff]
    %v48 = vld [vmem:[#allocation5 + $0x50] sm:$0xff]
    %v49 = vld [vmem:[#allocation5 + $0x58] sm:$0xff]
    %v50 = vld [vmem:[#allocation5 + $0x60] sm:$0xff]
    %v51 = vld [vmem:[#allocation5 + $0x68] sm:$0xff]
    %v52 = vld [vmem:[#allocation5 + $0x70] sm:$0xff]
    %v53 = vld [vmem:[#allocation5 + $0x78] sm:$0xff]
    %v54 = vld [vmem:[#allocation5 + $0x80] sm:$0xff]
    %v55 = vld [vmem:[#allocation5 + $0x88] sm:$0xff]
    %v56 = vld [vmem:[#allocation5 + $0x90] sm:$0xff]
    %v57 = vld [vmem:[#allocation5 + $0x98] sm:$0xff]
    %v58 = vld [vmem:[#allocation5 + $0xa0] sm:$0xff]
    %v59 = vld [vmem:[#allocation5 + $0xa8] sm:$0xff]
    %v60 = vld [vmem:[#allocation5 + $0xb0] sm:$0xff]
    %v61 = vld [vmem:[#allocation5 + $0xb8] sm:$0xff]
    %v62 = vld [vmem:[#allocation5 + $0xc0] sm:$0xff]
    %v63 = vld [vmem:[#allocation5 + $0xc8] sm:$0xff]
    %v64 = vld [vmem:[#allocation5 + $0xd0] sm:$0xff]
    %v65 = vld [vmem:[#allocation5 + $0xd8] sm:$0xff]
    %v66 = vld [vmem:[#allocation5 + $0xe0] sm:$0xff]
    %v67 = vld [vmem:[#allocation5 + $0xe8] sm:$0xff]
    %v68 = vld [vmem:[#allocation5 + $0xf0] sm:$0xff]
    %v69 = vld [vmem:[#allocation5 + $0xf8] sm:$0xff]
    %v70 = vld [vmem:[#allocation5 + $0x100] sm:$0xff]
    %v71 = vld [vmem:[#allocation5 + $0x108] sm:$0xff]
    %v72 = vld [vmem:[#allocation5 + $0x110] sm:$0xff]
    %v73 = vld [vmem:[#allocation5 + $0x118] sm:$0xff]
    %v74 = vld [vmem:[#allocation5 + $0x120] sm:$0xff]
    %v75 = vld [vmem:[#allocation5 + $0x128] sm:$0xff]
    %v76 = vld [vmem:[#allocation5 + $0x130] sm:$0xff]
    %v77 = vld [vmem:[#allocation5 + $0x138] sm:$0xff]
    %v78 = vld [vmem:[#allocation5 + $0x140] sm:$0xff]
    %v79 = vld [vmem:[#allocation5 + $0x148] sm:$0xff]
    %v80 = vld [vmem:[#allocation5 + $0x150] sm:$0xff]
    %v81 = vld [vmem:[#allocation5 + $0x158] sm:$0xff]
    %v82 = vld [vmem:[#allocation5 + $0x160] sm:$0xff]
    %v83 = vld [vmem:[#allocation5 + $0x168] sm:$0xff]
    %v84 = vld [vmem:[#allocation5 + $0x170] sm:$0xff]
    %v85 = vld [vmem:[#allocation5 + $0x178] sm:$0xff]
    %v86 = vld [vmem:[#allocation5 + $0x180] sm:$0xff]
    %v87 = vld [vmem:[#allocation5 + $0x188] sm:$0xff]
    %v88 = vld [vmem:[#allocation5 + $0x190] sm:$0xff]
    %v89 = vld [vmem:[#allocation5 + $0x198] sm:$0xff]
    %v90 = vld [vmem:[#allocation5 + $0x1a0] sm:$0x1]
    %v91 = vld [vmem:[#allocation5 + $0x1a8] sm:$0x1]
    %v92 = vld [vmem:[#allocation5 + $0x1b0] sm:$0x1]
    %v93 = vld [vmem:[#allocation5 + $0x1b8] sm:$0x1]
    %v94 = vlaneseq
    %v95 = vshrl.u32 %v94, 7
    %v96 = vsub.s32 0, %v95
    %v97 = vrot.slane %v90, %v96
    %vm98 = vcmask 171008
    %v100 = vsel %vm98, %v38, 0
    %vm102 = vcmask 1044480
    %v104 = vsel %vm102, %v41, 0
    %106 = vmatprep.subr.mxu0 0.0
    %107 = vmatpush1.msra.mxu0 %v39
    %108 = vmatprep.subr.mxu0 0.0
    %109 = vmatpush1.msra.mxu0 %v40
    %110 = vmatprep.subr.mxu0 0.0
    %111 = vmatpush1.msra.mxu0 %v104
    %112 = vmatprep.subr.mxu0 0.0
    %113 = vmatpush1.msra.mxu0 0.0
    %114 = vmatprep.subr.mxu0 0.0
    %115 = vmatpush1.msra.mxu0 0.0
    %116 = vmatprep.subr.mxu0 0.0
    %117 = vmatpush1.msra.mxu0 0.0
    %118 = vmatprep.subr.mxu0 0.0
    %119 = vmatpush1.msra.mxu0 0.0
    %120 = vmatprep.subr.mxu0 0.0
    %121 = vmatpush1.msra.mxu0 0.0
    %122 = vmatprep.subr.mxu0 0.0
    %123 = vmatpush1.msra.mxu0 0.0
    %124 = vmatprep.subr.mxu0 0.0
    %125 = vmatpush1.msra.mxu0 0.0
    %126 = vmatprep.subr.mxu0 0.0
    %127 = vmatpush1.msra.mxu0 0.0
    %128 = vmatprep.subr.mxu0 0.0
    %129 = vmatpush1.msra.mxu0 0.0
    %130 = vmatprep.subr.mxu0 0.0
    %131 = vmatpush1.msra.mxu0 0.0
    %132 = vmatprep.subr.mxu0 0.0
    %133 = vmatpush1.msra.mxu0 0.0
    %134 = vmatprep.subr.mxu0 0.0
    %135 = vmatpush1.msra.mxu0 0.0
    %136 = vmatprep.subr.mxu0 0.0
    %137 = vmatpush1.msra.mxu0 0.0
    %138 = vmatprep.subr.mxu0 0.0
    %139 = vmatpush1.msra.mxu0 0.0
    %140 = vmatprep.subr.mxu0 0.0
    %141 = vmatpush1.msra.mxu0 0.0
    %142 = vmatprep.subr.mxu0 0.0
    %143 = vmatpush1.msra.mxu0 0.0
    %144 = vmatprep.subr.mxu0 0.0
    %145 = vmatpush1.msra.mxu0 0.0
    %146 = vmatprep.subr.mxu0 0.0
    %147 = vmatpush1.msra.mxu0 0.0
    %148 = vmatprep.subr.mxu0 0.0
    %149 = vmatpush1.msra.mxu0 0.0
    %150 = vmatprep.subr.mxu0 0.0
    %151 = vmatpush1.msra.mxu0 0.0
    %152 = vmatprep.subr.mxu0 0.0
    %153 = vmatpush1.msra.mxu0 0.0
    %154 = vmatprep.subr.mxu0 0.0
    %155 = vmatpush1.msra.mxu0 0.0
    %156 = vmatprep.subr.mxu0 0.0
    %157 = vmatpush1.msra.mxu0 0.0
    %158 = vmatprep.subr.mxu0 0.0
    %159 = vmatpush1.msra.mxu0 0.0
    %160 = vmatprep.subr.mxu0 0.0
    %161 = vmatpush1.msra.mxu0 0.0
    %162 = vmatprep.subr.mxu0 0.0
    %163 = vmatpush1.msra.mxu0 0.0
    %164 = vmatprep.subr.mxu0 0.0
    %165 = vmatpush1.msra.mxu0 0.0
    %166 = vmatprep.subr.mxu0 0.0
    %167 = vmatpush1.msra.mxu0 0.0
    %168 = vmatprep.subr.mxu0 0.0
    %169 = vmatpush1.msra.mxu0 0.0
    %170 = vmatprep.mubr.f32.mxu0 0.0
    %171 = vmatmul.mubr.f32.gmra.mrb[0].mxu0 %v100
    %v172 = vpop.f32.mrb[0].mxu0
    %v173 = vadd.f32 %v97, %v172
    %v174 = vpop.f32.mrb[0].mxu0
    %175 = vdwg.mxu0
    %v176 = vmax.f32 %v173, 0.0
    %v177 = vlaneseq
    %v178 = vshrl.u32 %v177, 7
    %v179 = vsub.s32 0, %v178
    %v180 = vrot.slane %v91, %v179
    %181 = vmatprep.subr.mxu0 0.0
    %182 = vmatpush1.msra.mxu0 %v42
    %183 = vmatprep.subr.mxu0 0.0
    %184 = vmatpush1.msra.mxu0 %v43
    %185 = vmatprep.subr.mxu0 0.0
    %186 = vmatpush1.msra.mxu0 %v44
    %187 = vmatprep.subr.mxu0 0.0
    %188 = vmatpush1.msra.mxu0 %v45
    %189 = vmatprep.subr.mxu0 0.0
    %190 = vmatpush1.msra.mxu0 %v46
    %191 = vmatprep.subr.mxu0 0.0
    %192 = vmatpush1.msra.mxu0 %v47
    %193 = vmatprep.subr.mxu0 0.0
    %194 = vmatpush1.msra.mxu0 %v48
    %195 = vmatprep.subr.mxu0 0.0
    %196 = vmatpush1.msra.mxu0 %v49
    %197 = vmatprep.subr.mxu0 0.0
    %198 = vmatpush1.msra.mxu0 %v50
    %199 = vmatprep.subr.mxu0 0.0
    %200 = vmatpush1.msra.mxu0 %v51
    %201 = vmatprep.subr.mxu0 0.0
    %202 = vmatpush1.msra.mxu0 %v52
    %203 = vmatprep.subr.mxu0 0.0
    %204 = vmatpush1.msra.mxu0 %v53
    %205 = vmatprep.subr.mxu0 0.0
    %206 = vmatpush1.msra.mxu0 %v54
    %207 = vmatprep.subr.mxu0 0.0
    %208 = vmatpush1.msra.mxu0 %v55
    %209 = vmatprep.subr.mxu0 0.0
    %210 = vmatpush1.msra.mxu0 %v56
    %211 = vmatprep.subr.mxu0 0.0
    %212 = vmatpush1.msra.mxu0 %v57
    %213 = vmatprep.subr.mxu0 0.0
    %214 = vmatpush1.msra.mxu0 0.0
    %215 = vmatprep.subr.mxu0 0.0
    %216 = vmatpush1.msra.mxu0 0.0
    %217 = vmatprep.subr.mxu0 0.0
    %218 = vmatpush1.msra.mxu0 0.0
    %219 = vmatprep.subr.mxu0 0.0
    %220 = vmatpush1.msra.mxu0 0.0
    %221 = vmatprep.subr.mxu0 0.0
    %222 = vmatpush1.msra.mxu0 0.0
    %223 = vmatprep.subr.mxu0 0.0
    %224 = vmatpush1.msra.mxu0 0.0
    %225 = vmatprep.subr.mxu0 0.0
    %226 = vmatpush1.msra.mxu0 0.0
    %227 = vmatprep.subr.mxu0 0.0
    %228 = vmatpush1.msra.mxu0 0.0
    %229 = vmatprep.subr.mxu0 0.0
    %230 = vmatpush1.msra.mxu0 0.0
    %231 = vmatprep.subr.mxu0 0.0
    %232 = vmatpush1.msra.mxu0 0.0
    %233 = vmatprep.subr.mxu0 0.0
    %234 = vmatpush1.msra.mxu0 0.0
    %235 = vmatprep.subr.mxu0 0.0
    %236 = vmatpush1.msra.mxu0 0.0
    %237 = vmatprep.subr.mxu0 0.0
    %238 = vmatpush1.msra.mxu0 0.0
    %239 = vmatprep.subr.mxu0 0.0
    %240 = vmatpush1.msra.mxu0 0.0
    %241 = vmatprep.subr.mxu0 0.0
    %242 = vmatpush1.msra.mxu0 0.0
    %243 = vmatprep.subr.mxu0 0.0
    %244 = vmatpush1.msra.mxu0 0.0
    %245 = vmatprep.mubr.f32.mxu0 0.0
    %246 = vmatmul.mubr.f32.gmra.mrb[0].mxu0 %v176
    %v247 = vpop.f32.mrb[0].mxu0
    %v248 = vadd.f32 %v180, %v247
    %v249 = vpop.f32.mrb[0].mxu0
    %250 = vdwg.mxu0
    %v251 = vmax.f32 %v248, 0.0
    %v252 = vlaneseq
    %v253 = vshrl.u32 %v252, 7
    %v254 = vsub.s32 0, %v253
    %v255 = vrot.slane %v92, %v254
    %256 = vmatprep.subr.mxu0 0.0
    %257 = vmatpush1.msra.mxu0 %v58
    %258 = vmatprep.subr.mxu0 0.0
    %259 = vmatpush1.msra.mxu0 %v59
    %260 = vmatprep.subr.mxu0 0.0
    %261 = vmatpush1.msra.mxu0 %v60
    %262 = vmatprep.subr.mxu0 0.0
    %263 = vmatpush1.msra.mxu0 %v61
    %264 = vmatprep.subr.mxu0 0.0
    %265 = vmatpush1.msra.mxu0 %v62
    %266 = vmatprep.subr.mxu0 0.0
    %267 = vmatpush1.msra.mxu0 %v63
    %268 = vmatprep.subr.mxu0 0.0
    %269 = vmatpush1.msra.mxu0 %v64
    %270 = vmatprep.subr.mxu0 0.0
    %271 = vmatpush1.msra.mxu0 %v65
    %272 = vmatprep.subr.mxu0 0.0
    %273 = vmatpush1.msra.mxu0 %v66
    %274 = vmatprep.subr.mxu0 0.0
    %275 = vmatpush1.msra.mxu0 %v67
    %276 = vmatprep.subr.mxu0 0.0
    %277 = vmatpush1.msra.mxu0 %v68
    %278 = vmatprep.subr.mxu0 0.0
    %279 = vmatpush1.msra.mxu0 %v69
    %280 = vmatprep.subr.mxu0 0.0
    %281 = vmatpush1.msra.mxu0 %v70
    %282 = vmatprep.subr.mxu0 0.0
    %283 = vmatpush1.msra.mxu0 %v71
    %284 = vmatprep.subr.mxu0 0.0
    %285 = vmatpush1.msra.mxu0 %v72
    %286 = vmatprep.subr.mxu0 0.0
    %287 = vmatpush1.msra.mxu0 %v73
    %288 = vmatprep.subr.mxu0 0.0
    %289 = vmatpush1.msra.mxu0 0.0
    %290 = vmatprep.subr.mxu0 0.0
    %291 = vmatpush1.msra.mxu0 0.0
    %292 = vmatprep.subr.mxu0 0.0
    %293 = vmatpush1.msra.mxu0 0.0
    %294 = vmatprep.subr.mxu0 0.0
    %295 = vmatpush1.msra.mxu0 0.0
    %296 = vmatprep.subr.mxu0 0.0
    %297 = vmatpush1.msra.mxu0 0.0
    %298 = vmatprep.subr.mxu0 0.0
    %299 = vmatpush1.msra.mxu0 0.0
    %300 = vmatprep.subr.mxu0 0.0
    %301 = vmatpush1.msra.mxu0 0.0
    %302 = vmatprep.subr.mxu0 0.0
    %303 = vmatpush1.msra.mxu0 0.0
    %304 = vmatprep.subr.mxu0 0.0
    %305 = vmatpush1.msra.mxu0 0.0
    %306 = vmatprep.subr.mxu0 0.0
    %307 = vmatpush1.msra.mxu0 0.0
    %308 = vmatprep.subr.mxu0 0.0
    %309 = vmatpush1.msra.mxu0 0.0
    %310 = vmatprep.subr.mxu0 0.0
    %311 = vmatpush1.msra.mxu0 0.0
    %312 = vmatprep.subr.mxu0 0.0
    %313 = vmatpush1.msra.mxu0 0.0
    %314 = vmatprep.subr.mxu0 0.0
    %315 = vmatpush1.msra.mxu0 0.0
    %316 = vmatprep.subr.mxu0 0.0
    %317 = vmatpush1.msra.mxu0 0.0
    %318 = vmatprep.subr.mxu0 0.0
    %319 = vmatpush1.msra.mxu0 0.0
    %320 = vmatprep.mubr.f32.mxu0 0.0
    %321 = vmatmul.mubr.f32.gmra.mrb[0].mxu0 %v251
    %v322 = vpop.f32.mrb[0].mxu0
    %v323 = vadd.f32 %v255, %v322
    %v324 = vpop.f32.mrb[0].mxu0
    %325 = vdwg.mxu0
    %v326 = vmax.f32 %v323, 0.0
    %v327 = vlaneseq
    %v328 = vshrl.u32 %v327, 7
    %v329 = vsub.s32 0, %v328
    %v330 = vrot.slane %v93, %v329
    %331 = vmatprep.subr.mxu0 0.0
    %332 = vmatpush1.msra.mxu0 %v74
    %333 = vmatprep.subr.mxu0 0.0
    %334 = vmatpush1.msra.mxu0 %v75
    %335 = vmatprep.subr.mxu0 0.0
    %336 = vmatpush1.msra.mxu0 %v76
    %337 = vmatprep.subr.mxu0 0.0
    %338 = vmatpush1.msra.mxu0 %v77
    %339 = vmatprep.subr.mxu0 0.0
    %340 = vmatpush1.msra.mxu0 %v78
    %341 = vmatprep.subr.mxu0 0.0
    %342 = vmatpush1.msra.mxu0 %v79
    %343 = vmatprep.subr.mxu0 0.0
    %344 = vmatpush1.msra.mxu0 %v80
    %345 = vmatprep.subr.mxu0 0.0
    %346 = vmatpush1.msra.mxu0 %v81
    %347 = vmatprep.subr.mxu0 0.0
    %348 = vmatpush1.msra.mxu0 %v82
    %349 = vmatprep.subr.mxu0 0.0
    %350 = vmatpush1.msra.mxu0 %v83
    %351 = vmatprep.subr.mxu0 0.0
    %352 = vmatpush1.msra.mxu0 %v84
    %353 = vmatprep.subr.mxu0 0.0
    %354 = vmatpush1.msra.mxu0 %v85
    %355 = vmatprep.subr.mxu0 0.0
    %356 = vmatpush1.msra.mxu0 %v86
    %357 = vmatprep.subr.mxu0 0.0
    %358 = vmatpush1.msra.mxu0 %v87
    %359 = vmatprep.subr.mxu0 0.0
    %360 = vmatpush1.msra.mxu0 %v88
    %361 = vmatprep.subr.mxu0 0.0
    %362 = vmatpush1.msra.mxu0 %v89
    %363 = vmatprep.subr.mxu0 0.0
    %364 = vmatpush1.msra.mxu0 0.0
    %365 = vmatprep.subr.mxu0 0.0
    %366 = vmatpush1.msra.mxu0 0.0
    %367 = vmatprep.subr.mxu0 0.0
    %368 = vmatpush1.msra.mxu0 0.0
    %369 = vmatprep.subr.mxu0 0.0
    %370 = vmatpush1.msra.mxu0 0.0
    %371 = vmatprep.subr.mxu0 0.0
    %372 = vmatpush1.msra.mxu0 0.0
    %373 = vmatprep.subr.mxu0 0.0
    %374 = vmatpush1.msra.mxu0 0.0
    %375 = vmatprep.subr.mxu0 0.0
    %376 = vmatpush1.msra.mxu0 0.0
    %377 = vmatprep.subr.mxu0 0.0
    %378 = vmatpush1.msra.mxu0 0.0
    %379 = vmatprep.subr.mxu0 0.0
    %380 = vmatpush1.msra.mxu0 0.0
    %381 = vmatprep.subr.mxu0 0.0
    %382 = vmatpush1.msra.mxu0 0.0
    %383 = vmatprep.subr.mxu0 0.0
    %384 = vmatpush1.msra.mxu0 0.0
    %385 = vmatprep.subr.mxu0 0.0
    %386 = vmatpush1.msra.mxu0 0.0
    %387 = vmatprep.subr.mxu0 0.0
    %388 = vmatpush1.msra.mxu0 0.0
    %389 = vmatprep.subr.mxu0 0.0
    %390 = vmatpush1.msra.mxu0 0.0
    %391 = vmatprep.subr.mxu0 0.0
    %392 = vmatpush1.msra.mxu0 0.0
    %393 = vmatprep.subr.mxu0 0.0
    %394 = vmatpush1.msra.mxu0 0.0
    %395 = vmatprep.mubr.f32.mxu0 0.0
    %396 = vmatmul.mubr.f32.gmra.mrb[0].mxu0 %v326
    %v397 = vpop.f32.mrb[0].mxu0
    %v398 = vadd.f32 %v330, %v397
    %v399 = vpop.f32.mrb[0].mxu0
    %400 = vdwg.mxu0
    %401 = vst [vmem:[#allocation7] sm:$0xff] %v398
    // Predicated region
    $region18: #{tpu_custom_call.1} parent=1 // pred_check
      _
    $region19: #{tpu_custom_call.1} parent=1 // pred_check_branch
      %403 = sbr.rel (0) target = $region21
    $region20: #{tpu_custom_call.1} parent=1 // pred_region
      %s405 = ssub.s32 128, 128
      %406 = vsyncadd [#allocation4], %s405
      %s408 = sshll.u32 [#allocation7], 4
      %s409 = int_to_ptr.vmem [resolvable:$true] %s408
      %411 = dma.vmem_to_hbm [thread:$0]  %s409, 128, %s2, [#allocation4]
    $region21: #{tpu_custom_call.1} parent=1 // pred_fallthru
      _
    // Predicated region
    $region22: #{tpu_custom_call.1} parent=1 // pred_check
      _
    $region23: #{tpu_custom_call.1} parent=1 // pred_check_branch
      %413 = sbr.rel (0) target = $region25
    $region24: #{tpu_custom_call.1} parent=1 // pred_region
      %414 = dma.done [#allocation4], 128
    $region25: #{tpu_custom_call.1} parent=1 // pred_fallthru
      _
    %415 = vsyncpa [#allocation3], 1
    %416 = vsyncpa [#allocation6], 1
    %417 = vsyncpa [#allocation4], 1

</llo_original>
